<compile_context>
chip_gen: v5e
topology: v5e:2x2
jax: 0.10.0
libtpu: 0.0.40
codegen_flags: <defaults>
</compile_context>

<pallas_src>
import math

import jax
import jax.numpy as jnp
import numpy as np
from jax.experimental import pallas as pl
from jax.experimental.pallas import tpu as pltpu


def _round_up(x, m):
    return ((x + m - 1) // m) * m


def _critic_kernel(obs_ref, act_ref, w1o_ref, w1a_ref, b1_ref,
                   w2_ref, b2_ref, w3t_ref, b3_ref, o_ref):
    compute_dtype = w1o_ref.dtype

    obs = obs_ref[...]
    act = act_ref[...]

    # Layer 1 (MXU): split matmul replaces concat([obs, action]) @ W1; + bias,
    # ReLU. f32 accumulation regardless of operand dtype.
    h = (jnp.dot(obs, w1o_ref[...], preferred_element_type=jnp.float32)
         + jnp.dot(act, w1a_ref[...], preferred_element_type=jnp.float32)
         + b1_ref[...])
    h = jnp.maximum(h, 0.0)

    # Layer 2 (MXU): Linear + ReLU, f32 accumulation.
    h = jnp.maximum(
        jnp.dot(h.astype(compute_dtype), w2_ref[...],
                preferred_element_type=jnp.float32) + b2_ref[...],
        0.0,
    )

    # Output layer (VPU + XLU): out_features == 1, so a broadcast multiply and
    # a lane reduction replace a degenerate (H, 1) MXU pass, keeping the MXU
    # free for layers 1 and 2. All in f32.
    q = jnp.sum(h * w3t_ref[...], axis=-1, keepdims=True) + b3_ref[...]
    o_ref[...] = q.astype(o_ref.dtype)


def critic_forward(obs, action, params, *, block_m=1024,
                   compute_dtype=jnp.float32):
    """Pallas forward pass of the Critic MLP.

    obs:    (B, obs_dim)    float32
    action: (B, action_dim) float32
    returns (B, 1)          float32
    """
    w1o, w1a, b1, w2, b2, w3t, b3 = params
    B, obs_dim = obs.shape
    action_dim = action.shape[1]

    # Batch tile: multiple of 8 sublanes, capped for the VMEM budget.
    tm = min(block_m, _round_up(B, 8))
    tm = _round_up(tm, 8)
    Bp = _round_up(B, tm)
    padded = Bp != B
    if padded:
        pad = Bp - B
        obs = jnp.pad(obs, ((0, pad), (0, 0)))
        action = jnp.pad(action, ((0, pad), (0, 0)))

    # Optional bf16 operand path for the MXU matmuls (v6e/v7x fast path);
    # biases and the VPU-side output weights stay f32.
    if compute_dtype != jnp.float32:
        obs = obs.astype(compute_dtype)
        action = action.astype(compute_dtype)
        w1o = w1o.astype(compute_dtype)
        w1a = w1a.astype(compute_dtype)
        w2 = w2.astype(compute_dtype)

    grid = (Bp // tm,)

    def row_spec(d):
        return pl.BlockSpec((tm, d), lambda i: (i, 0))

    def resident_spec(shape):
        # Same block index every grid step -> DMA'd once, stays VMEM-resident.
        return pl.BlockSpec(shape, lambda i: (0, 0))

    out = pl.pallas_call(
        _critic_kernel,
        out_shape=jax.ShapeDtypeStruct((Bp, 1), jnp.float32),
        grid=grid,
        in_specs=[
            row_spec(obs_dim),
            row_spec(action_dim),
            resident_spec(w1o.shape),
            resident_spec(w1a.shape),
            resident_spec(b1.shape),
            resident_spec(w2.shape),
            resident_spec(b2.shape),
            resident_spec(w3t.shape),
            resident_spec(b3.shape),
        ],
        out_specs=pl.BlockSpec((tm, 1), lambda i: (i, 0)),
        compiler_params=pltpu.CompilerParams(
            dimension_semantics=("parallel",),  # v7x: shard batch over 2 TCs
        ),
    )(obs, action, w1o, w1a, b1, w2, b2, w3t, b3)

    return out[:B] if padded else out


def init_critic_params(key, obs_dim, action_dim, hidden_sizes=(256, 256)):
    """Deterministic init mirroring nn.Linear's default U(-1/sqrt(fan_in), +).

    W1 is split into (obs_dim, H1) and (action_dim, H1) pieces so the kernel
    avoids the concat (numerically identical to concat([obs, act]) @ W1), and
    the output-layer weight is stored as a (1, H) row for the in-kernel
    VPU/XLU reduction.
    """
    dims = [obs_dim + action_dim, *hidden_sizes, 1]
    raw = []
    for i in range(len(dims) - 1):
        fan_in, fan_out = dims[i], dims[i + 1]
        key, kw, kb = jax.random.split(key, 3)
        bound = 1.0 / math.sqrt(fan_in)
        w = jax.random.uniform(kw, (fan_in, fan_out), jnp.float32, -bound, bound)
        b = jax.random.uniform(kb, (1, fan_out), jnp.float32, -bound, bound)
        raw.extend([w, b])
    w1, b1, w2, b2, w3, b3 = raw
    w1o, w1a = w1[:obs_dim], w1[obs_dim:]
    w3t = w3.reshape(1, -1)  # (H, 1) -> (1, H)
    return (w1o, w1a, b1, w2, b2, w3t, b3)


def critic_reference(obs, action, params):
    """Pure-JAX reference matching the PyTorch module."""
    w1o, w1a, b1, w2, b2, w3t, b3 = params
    x = jnp.concatenate([obs, action], axis=-1)
    w1 = jnp.concatenate([w1o, w1a], axis=0)
    x = jnp.maximum(x @ w1 + b1, 0.0)
    x = jnp.maximum(x @ w2 + b2, 0.0)
    return x @ w3t.T + b3


if __name__ == "__main__":
    key = jax.random.PRNGKey(0)
    k_obs, k_act, k_par = jax.random.split(key, 3)

    batch, obs_dim, action_dim = 64, 11, 3
    hidden_sizes = (256, 256)  # module default

    obs = jax.random.normal(k_obs, (batch, obs_dim), jnp.float32)
    action = jax.random.normal(k_act, (batch, action_dim), jnp.float32)
    params = init_critic_params(k_par, obs_dim, action_dim, hidden_sizes)

    # f32 path (exact module semantics), single batch tile.
    out = jax.block_until_ready(critic_forward(obs, action, params))
    ref = critic_reference(obs, action, params)
    assert out.shape == (batch, 1), out.shape
    np.testing.assert_allclose(np.asarray(out), np.asarray(ref),
                               rtol=1e-5, atol=1e-5)

    # Multi-tile grid path (batch padding + resident weights) with bf16
    # MXU operands / f32 accumulation — the v6e/v7x fast path.
    batch2 = 600
    k_o2, k_a2 = jax.random.split(jax.random.PRNGKey(1))
    obs2 = jax.random.normal(k_o2, (batch2, obs_dim), jnp.float32)
    act2 = jax.random.normal(k_a2, (batch2, action_dim), jnp.float32)
    out2 = jax.block_until_ready(
        critic_forward(obs2, act2, params, block_m=256,
                       compute_dtype=jnp.bfloat16))
    ref2 = critic_reference(obs2, act2, params)
    assert out2.shape == (batch2, 1), out2.shape
    np.testing.assert_allclose(np.asarray(out2), np.asarray(ref2),
                               rtol=5e-2, atol=5e-2)

    print("KERNEL_OK")
</pallas_src>

<mosaic_0001>
module attributes {stable_mosaic.version = 11 : i64} {
  func.func @_critic_kernel(%arg0: i32, %arg1: memref<64x11xf32, #tpu.memory_space<vmem>>, %arg2: memref<64x3xf32, #tpu.memory_space<vmem>>, %arg3: memref<11x256xf32, #tpu.memory_space<vmem>>, %arg4: memref<3x256xf32, #tpu.memory_space<vmem>>, %arg5: memref<1x256xf32, #tpu.memory_space<vmem>>, %arg6: memref<256x256xf32, #tpu.memory_space<vmem>>, %arg7: memref<1x256xf32, #tpu.memory_space<vmem>>, %arg8: memref<1x256xf32, #tpu.memory_space<vmem>>, %arg9: memref<1x1xf32, #tpu.memory_space<vmem>>, %arg10: memref<64x1xf32, #tpu.memory_space<vmem>>) attributes {dimension_semantics = [#tpu.dimension_semantics<parallel>], iteration_bounds = array<i64: 1>, scalar_prefetch = 0 : i64, scratch_operands = 0 : i64, tpu.core_type = #tpu.core_type<tc>, window_params = [{transform_indices = @transform_0, window_bounds = array<i64: 64, 11>}, {transform_indices = @transform_1, window_bounds = array<i64: 64, 3>}, {pipeline_mode = #tpu.pipeline_mode<synchronous>, transform_indices = @transform_2, window_bounds = array<i64: 11, 256>}, {pipeline_mode = #tpu.pipeline_mode<synchronous>, transform_indices = @transform_3, window_bounds = array<i64: 3, 256>}, {pipeline_mode = #tpu.pipeline_mode<synchronous>, transform_indices = @transform_4, window_bounds = array<i64: 1, 256>}, {pipeline_mode = #tpu.pipeline_mode<synchronous>, transform_indices = @transform_5, window_bounds = array<i64: 256, 256>}, {pipeline_mode = #tpu.pipeline_mode<synchronous>, transform_indices = @transform_6, window_bounds = array<i64: 1, 256>}, {pipeline_mode = #tpu.pipeline_mode<synchronous>, transform_indices = @transform_7, window_bounds = array<i64: 1, 256>}, {pipeline_mode = #tpu.pipeline_mode<synchronous>, transform_indices = @transform_8, window_bounds = array<i64: 1, 1>}, {transform_indices = @transform_9, window_bounds = array<i64: 64, 1>}]} {
    %c0 = arith.constant 0 : index
    %c0_0 = arith.constant 0 : index
    %0 = vector.load %arg1[%c0, %c0_0] : memref<64x11xf32, #tpu.memory_space<vmem>>, vector<64x11xf32>
    %c0_1 = arith.constant 0 : index
    %c0_2 = arith.constant 0 : index
    %1 = vector.load %arg2[%c0_1, %c0_2] : memref<64x3xf32, #tpu.memory_space<vmem>>, vector<64x3xf32>
    %c0_3 = arith.constant 0 : index
    %c0_4 = arith.constant 0 : index
    %2 = vector.load %arg3[%c0_3, %c0_4] : memref<11x256xf32, #tpu.memory_space<vmem>>, vector<11x256xf32>
    %cst = arith.constant dense<0.000000e+00> : vector<64x256xf32>
    %3 = tpu.matmul %0, %2, %cst {dimension_numbers = #tpu.dot_dimension_numbers<[1], [0], [0], [1], [0, 0, 1, 1], [], []>} : vector<64x11xf32>, vector<11x256xf32>, vector<64x256xf32> -> vector<64x256xf32>
    %c0_5 = arith.constant 0 : index
    %c0_6 = arith.constant 0 : index
    %4 = vector.load %arg4[%c0_5, %c0_6] : memref<3x256xf32, #tpu.memory_space<vmem>>, vector<3x256xf32>
    %cst_7 = arith.constant dense<0.000000e+00> : vector<64x256xf32>
    %5 = tpu.matmul %1, %4, %cst_7 {dimension_numbers = #tpu.dot_dimension_numbers<[1], [0], [0], [1], [0, 0, 1, 1], [], []>} : vector<64x3xf32>, vector<3x256xf32>, vector<64x256xf32> -> vector<64x256xf32>
    %6 = arith.addf %3, %5 : vector<64x256xf32>
    %c0_8 = arith.constant 0 : index
    %c0_9 = arith.constant 0 : index
    %7 = vector.load %arg5[%c0_8, %c0_9] : memref<1x256xf32, #tpu.memory_space<vmem>>, vector<1x256xf32>
    %8 = vector.broadcast %7 : vector<1x256xf32> to vector<64x256xf32>
    %9 = arith.addf %6, %8 : vector<64x256xf32>
    %cst_10 = arith.constant 0.000000e+00 : f32
    %10 = vector.broadcast %cst_10 : f32 to vector<64x256xf32>
    %11 = arith.maximumf %9, %10 : vector<64x256xf32>
    %c0_11 = arith.constant 0 : index
    %c0_12 = arith.constant 0 : index
    %12 = vector.load %arg6[%c0_11, %c0_12] : memref<256x256xf32, #tpu.memory_space<vmem>>, vector<256x256xf32>
    %cst_13 = arith.constant dense<0.000000e+00> : vector<64x256xf32>
    %13 = tpu.matmul %11, %12, %cst_13 {dimension_numbers = #tpu.dot_dimension_numbers<[1], [0], [0], [1], [0, 0, 1, 1], [], []>} : vector<64x256xf32>, vector<256x256xf32>, vector<64x256xf32> -> vector<64x256xf32>
    %c0_14 = arith.constant 0 : index
    %c0_15 = arith.constant 0 : index
    %14 = vector.load %arg7[%c0_14, %c0_15] : memref<1x256xf32, #tpu.memory_space<vmem>>, vector<1x256xf32>
    %15 = vector.broadcast %14 : vector<1x256xf32> to vector<64x256xf32>
    %16 = arith.addf %13, %15 : vector<64x256xf32>
    %cst_16 = arith.constant 0.000000e+00 : f32
    %17 = vector.broadcast %cst_16 : f32 to vector<64x256xf32>
    %18 = arith.maximumf %16, %17 : vector<64x256xf32>
    %c0_17 = arith.constant 0 : index
    %c0_18 = arith.constant 0 : index
    %19 = vector.load %arg8[%c0_17, %c0_18] : memref<1x256xf32, #tpu.memory_space<vmem>>, vector<1x256xf32>
    %20 = vector.broadcast %19 : vector<1x256xf32> to vector<64x256xf32>
    %21 = arith.mulf %18, %20 : vector<64x256xf32>
    %cst_19 = arith.constant dense<0.000000e+00> : vector<64xf32>
    %22 = vector.multi_reduction <add>, %21, %cst_19 [1] : vector<64x256xf32> to vector<64xf32>
    %23 = vector.shape_cast %22 : vector<64xf32> to vector<64x1xf32>
    %c0_20 = arith.constant 0 : index
    %c0_21 = arith.constant 0 : index
    %24 = vector.load %arg9[%c0_20, %c0_21] : memref<1x1xf32, #tpu.memory_space<vmem>>, vector<1x1xf32>
    %25 = vector.broadcast %24 : vector<1x1xf32> to vector<64x1xf32>
    %26 = arith.addf %23, %25 : vector<64x1xf32>
    %c0_22 = arith.constant 0 : index
    %c0_23 = arith.constant 0 : index
    %27 = vector.load %arg10[%c0_22, %c0_23] : memref<64x1xf32, #tpu.memory_space<vmem>>, vector<64x1xf32>
    tpu.vector_store %arg10[%c0_22, %c0_23], %26 {strides = array<i32>} : memref<64x1xf32, #tpu.memory_space<vmem>>, vector<64x1xf32>,
    return
  }
  func.func @transform_0(%arg0: i32) -> (i32, i32) {
    %c0_i32 = arith.constant 0 : i32
    %c0_i32_0 = arith.constant 0 : i32
    return %arg0, %c0_i32 : i32, i32
  }
  func.func @transform_1(%arg0: i32) -> (i32, i32) {
    %c0_i32 = arith.constant 0 : i32
    %c0_i32_0 = arith.constant 0 : i32
    return %arg0, %c0_i32 : i32, i32
  }
  func.func @transform_2(%arg0: i32) -> (i32, i32) {
    %c0_i32 = arith.constant 0 : i32
    %c0_i32_0 = arith.constant 0 : i32
    %c0_i32_1 = arith.constant 0 : i32
    return %c0_i32, %c0_i32_0 : i32, i32
  }
  func.func @transform_3(%arg0: i32) -> (i32, i32) {
    %c0_i32 = arith.constant 0 : i32
    %c0_i32_0 = arith.constant 0 : i32
    %c0_i32_1 = arith.constant 0 : i32
    return %c0_i32, %c0_i32_0 : i32, i32
  }
  func.func @transform_4(%arg0: i32) -> (i32, i32) {
    %c0_i32 = arith.constant 0 : i32
    %c0_i32_0 = arith.constant 0 : i32
    %c0_i32_1 = arith.constant 0 : i32
    return %c0_i32, %c0_i32_0 : i32, i32
  }
  func.func @transform_5(%arg0: i32) -> (i32, i32) {
    %c0_i32 = arith.constant 0 : i32
    %c0_i32_0 = arith.constant 0 : i32
    %c0_i32_1 = arith.constant 0 : i32
    return %c0_i32, %c0_i32_0 : i32, i32
  }
  func.func @transform_6(%arg0: i32) -> (i32, i32) {
    %c0_i32 = arith.constant 0 : i32
    %c0_i32_0 = arith.constant 0 : i32
    %c0_i32_1 = arith.constant 0 : i32
    return %c0_i32, %c0_i32_0 : i32, i32
  }
  func.func @transform_7(%arg0: i32) -> (i32, i32) {
    %c0_i32 = arith.constant 0 : i32
    %c0_i32_0 = arith.constant 0 : i32
    %c0_i32_1 = arith.constant 0 : i32
    return %c0_i32, %c0_i32_0 : i32, i32
  }
  func.func @transform_8(%arg0: i32) -> (i32, i32) {
    %c0_i32 = arith.constant 0 : i32
    %c0_i32_0 = arith.constant 0 : i32
    %c0_i32_1 = arith.constant 0 : i32
    return %c0_i32, %c0_i32_0 : i32, i32
  }
  func.func @transform_9(%arg0: i32) -> (i32, i32) {
    %c0_i32 = arith.constant 0 : i32
    %c0_i32_0 = arith.constant 0 : i32
    return %arg0, %c0_i32 : i32, i32
  }
}

</mosaic_0001>

<llo_original>
// kernel: tpu_custom_call.1
$region0: #{tpu_custom_call.1}
  #allocation0 [shape = 'u32[]', space=smem, size = 0x4, offset = 0x4, fixed_abs, tag = 'smem constant byte address 0x4 - core index']
  #allocation1 [shape = 'u32[72,128]{1,0:T(1,128)}', space=vmem, size = 0x9000, scoped, tag = 'internal scratch']
  #allocation2 [shape = 'f32[1,1]{1,0:T(1,128)S(1)}', space=vmem, size = 0x200, scoped, tag = 'scoped memory for tpu_custom_call.1']
  %s0 = inlined_call_operand.vmem [shape: f32[64,11], index: 0, kind: input, shape index: {}]
  %s1 = inlined_call_operand.vmem [shape: f32[64,3], index: 1, kind: input, shape index: {}]
  %s2 = inlined_call_operand.vmem [shape: f32[11,256], index: 2, kind: input, shape index: {}]
  %s3 = inlined_call_operand.vmem [shape: f32[3,256], index: 3, kind: input, shape index: {}]
  %s4 = inlined_call_operand.vmem [shape: f32[1,256], index: 4, kind: input, shape index: {}]
  %s5 = inlined_call_operand.hbm [shape: f32[256,256], index: 5, kind: input, shape index: {}]
  %s6 = inlined_call_operand.vmem [shape: f32[1,256], index: 6, kind: input, shape index: {}]
  %s7 = inlined_call_operand.vmem [shape: f32[1,256], index: 7, kind: input, shape index: {}]
  %s8 = inlined_call_operand.<no memory space> [shape: f32[1,1], index: 8, kind: input, shape index: {}]
  %s9 = inlined_call_operand.vmem [shape: f32[64,1], index: 9, kind: output, shape index: {}]
  %s10 = sld [smem:[#allocation0]]
  $region50: #{tpu_custom_call.1} parent=0
    _
  %s12 = ssub.s32 1, %s10
  %s13 = scalar_select 0, %s12, %s10
  %v14 = vstv %s8
  %15 = vst [vmem:[#allocation2] sm:$0x1] %v14
  $region1: #{tpu_custom_call.1} parent=0
    #allocation3 [shape = 'u8[262144]{0}', space=vmem, size = 0x40000, scoped, tag = 'input window, operand 5, single buffered']
    #allocation4 [shape = 's32[1]{0}', space=sflag, size = 0x4, scoped, tag = 'scoped memory for tpu_custom_call.1']
    %16 = vsyncpa [#allocation4], 0
    // Predicated region
    $region2: #{tpu_custom_call.1} parent=1 // pred_check
      _
    $region3: #{tpu_custom_call.1} parent=1 // pred_check_branch
      %18 = sbr.rel (0) target = $region5
    $region4: #{tpu_custom_call.1} parent=1 // pred_region
      _
    $region5: #{tpu_custom_call.1} parent=1 // pred_fallthru
      _
    // Predicated region
    $region6: #{tpu_custom_call.1} parent=1 // pred_check
      _
    $region7: #{tpu_custom_call.1} parent=1 // pred_check_branch
      %20 = sbr.rel (0) target = $region9
    $region8: #{tpu_custom_call.1} parent=1 // pred_region
      _
    $region9: #{tpu_custom_call.1} parent=1 // pred_fallthru
      _
    // Predicated region
    $region10: #{tpu_custom_call.1} parent=1 // pred_check
      _
    $region11: #{tpu_custom_call.1} parent=1 // pred_check_branch
      %22 = sbr.rel (0) target = $region13
    $region12: #{tpu_custom_call.1} parent=1 // pred_region
      _
    $region13: #{tpu_custom_call.1} parent=1 // pred_fallthru
      _
    // Predicated region
    $region14: #{tpu_custom_call.1} parent=1 // pred_check
      _
    $region15: #{tpu_custom_call.1} parent=1 // pred_check_branch
      %24 = sbr.rel (0) target = $region17
    $region16: #{tpu_custom_call.1} parent=1 // pred_region
      _
    $region17: #{tpu_custom_call.1} parent=1 // pred_fallthru
      _
    // Predicated region
    $region18: #{tpu_custom_call.1} parent=1 // pred_check
      _
    $region19: #{tpu_custom_call.1} parent=1 // pred_check_branch
      %26 = sbr.rel (0) target = $region21
    $region20: #{tpu_custom_call.1} parent=1 // pred_region
      _
    $region21: #{tpu_custom_call.1} parent=1 // pred_fallthru
      _
    // Predicated region
    $region22: #{tpu_custom_call.1} parent=1 // pred_check
      _
    $region23: #{tpu_custom_call.1} parent=1 // pred_check_branch
      %28 = sbr.rel (0) target = $region25
    $region24: #{tpu_custom_call.1} parent=1 // pred_region
      %30 = vsyncadd [#allocation4], 0
      %s31 = sshll.u32 %s5, 4
      %s32 = int_to_ptr.hbm [resolvable:$true] %s31
      %s33 = sshll.u32 [#allocation3], 4
      %s34 = int_to_ptr.vmem [resolvable:$true] %s33
      %39 = dma.hbm_to_vmem [thread:$0]  %s32, 8192, %s34, [#allocation4], 256, 256, 16
    $region25: #{tpu_custom_call.1} parent=1 // pred_fallthru
      _
    // Predicated region
    $region26: #{tpu_custom_call.1} parent=1 // pred_check
      _
    $region27: #{tpu_custom_call.1} parent=1 // pred_check_branch
      %41 = sbr.rel (0) target = $region29
    $region28: #{tpu_custom_call.1} parent=1 // pred_region
      _
    $region29: #{tpu_custom_call.1} parent=1 // pred_fallthru
      _
    // Predicated region
    $region30: #{tpu_custom_call.1} parent=1 // pred_check
      _
    $region31: #{tpu_custom_call.1} parent=1 // pred_check_branch
      %43 = sbr.rel (0) target = $region33
    $region32: #{tpu_custom_call.1} parent=1 // pred_region
      _
    $region33: #{tpu_custom_call.1} parent=1 // pred_fallthru
      _
    // Predicated region
    $region34: #{tpu_custom_call.1} parent=1 // pred_check
      _
    $region35: #{tpu_custom_call.1} parent=1 // pred_check_branch
      %45 = sbr.rel (0) target = $region37
    $region36: #{tpu_custom_call.1} parent=1 // pred_region
      _
    $region37: #{tpu_custom_call.1} parent=1 // pred_fallthru
      _
    // Predicated region
    $region38: #{tpu_custom_call.1} parent=1 // pred_check
      _
    $region39: #{tpu_custom_call.1} parent=1 // pred_check_branch
      %47 = sbr.rel (0) target = $region41
    $region40: #{tpu_custom_call.1} parent=1 // pred_region
      %49 = dma.done [#allocation4], 8192
    $region41: #{tpu_custom_call.1} parent=1 // pred_fallthru
      _
    %v50 = vld [vmem:[%s0] sm:$0xff]
    %v51 = vld [vmem:[%s0 + $0x8] sm:$0xff]
    %v52 = vld [vmem:[%s0 + $0x10] sm:$0xff]
    %v53 = vld [vmem:[%s0 + $0x18] sm:$0xff]
    %v54 = vld [vmem:[%s0 + $0x20] sm:$0xff]
    %v55 = vld [vmem:[%s0 + $0x28] sm:$0xff]
    %v56 = vld [vmem:[%s0 + $0x30] sm:$0xff]
    %v57 = vld [vmem:[%s0 + $0x38] sm:$0xff]
    %v58 = vld [vmem:[%s1] sm:$0xff]
    %v59 = vld [vmem:[%s1 + $0x8] sm:$0xff]
    %v60 = vld [vmem:[%s1 + $0x10] sm:$0xff]
    %v61 = vld [vmem:[%s1 + $0x18] sm:$0xff]
    %v62 = vld [vmem:[%s1 + $0x20] sm:$0xff]
    %v63 = vld [vmem:[%s1 + $0x28] sm:$0xff]
    %v64 = vld [vmem:[%s1 + $0x30] sm:$0xff]
    %v65 = vld [vmem:[%s1 + $0x38] sm:$0xff]
    %v66 = vld [vmem:[%s2] sm:$0xff]
    %v67 = vld [vmem:[%s2 + $0x8] sm:$0xff]
    %v68 = vld [vmem:[%s2 + $0x10] sm:$0x7]
    %v69 = vld [vmem:[%s2 + $0x18] sm:$0x7]
    %v70 = vld [vmem:[%s3] sm:$0x77]
    %72 = vst [vmem:[#allocation1] ss:$2 sm:$0xff] %v70
    %v73 = vld.sshfl [vmem:[#allocation1] sm:$0xff pattern:$0x75316420]
    %v74 = vld.sshfl [vmem:[#allocation1 + $0x8] sm:$0xff pattern:$0x75316420]
    %vm75 = vcmask 23552
    %v77 = vsel %vm75, %v58, 0
    %v80 = vsel %vm75, %v59, 0
    %v83 = vsel %vm75, %v60, 0
    %v86 = vsel %vm75, %v61, 0
    %v89 = vsel %vm75, %v62, 0
    %v92 = vsel %vm75, %v63, 0
    %v95 = vsel %vm75, %v64, 0
    %v98 = vsel %vm75, %v65, 0
    %vm100 = vcmask 1042432
    %v101 = vsel %vm100, %v73, 0
    %v103 = vsel %vm100, %v74, 0
    %105 = vmatpush.msra.mxu0 0.0
    %106 = vmatpush.msra.mxu0 0.0
    %107 = vmatpush.msra.mxu0 0.0
    %108 = vmatpush.msra.mxu0 0.0
    %109 = vmatpush.msra.mxu0 0.0
    %110 = vmatpush.msra.mxu0 0.0
    %111 = vmatpush.msra.mxu0 0.0
    %112 = vmatpush.msra.mxu0 0.0
    %113 = vmatpush.msra.mxu0 0.0
    %114 = vmatpush.msra.mxu0 0.0
    %115 = vmatpush.msra.mxu0 0.0
    %116 = vmatpush.msra.mxu0 0.0
    %117 = vmatpush.msra.mxu0 0.0
    %118 = vmatpush.msra.mxu0 0.0
    %119 = vmatpush.msra.mxu0 0.0
    %120 = vmatpush.msra.mxu0 %v101
    %121 = vmatmul.f32.gmra.mxu0 %v77
    %v122 = vpop.f32.mrf.mxu0
    %v123 = vadd.f32 0.0, %v122
    %124 = vmatmul.f32.gmra.mxu0 %v80
    %v125 = vpop.f32.mrf.mxu0
    %v126 = vadd.f32 0.0, %v125
    %127 = vmatmul.f32.gmra.mxu0 %v83
    %v128 = vpop.f32.mrf.mxu0
    %v129 = vadd.f32 0.0, %v128
    %130 = vmatmul.f32.gmra.mxu0 %v86
    %v131 = vpop.f32.mrf.mxu0
    %v132 = vadd.f32 0.0, %v131
    %133 = vmatmul.f32.gmra.mxu0 %v89
    %v134 = vpop.f32.mrf.mxu0
    %v135 = vadd.f32 0.0, %v134
    %136 = vmatmul.f32.gmra.mxu0 %v92
    %v137 = vpop.f32.mrf.mxu0
    %v138 = vadd.f32 0.0, %v137
    %139 = vmatmul.f32.gmra.mxu0 %v95
    %v140 = vpop.f32.mrf.mxu0
    %v141 = vadd.f32 0.0, %v140
    %142 = vmatmul.f32.gmra.mxu0 %v98
    %v143 = vpop.f32.mrf.mxu0
    %v144 = vadd.f32 0.0, %v143
    %145 = vdwg.mxu0
    %146 = vmatpush.msra.mxu0 0.0
    %147 = vmatpush.msra.mxu0 0.0
    %148 = vmatpush.msra.mxu0 0.0
    %149 = vmatpush.msra.mxu0 0.0
    %150 = vmatpush.msra.mxu0 0.0
    %151 = vmatpush.msra.mxu0 0.0
    %152 = vmatpush.msra.mxu0 0.0
    %153 = vmatpush.msra.mxu0 0.0
    %154 = vmatpush.msra.mxu0 0.0
    %155 = vmatpush.msra.mxu0 0.0
    %156 = vmatpush.msra.mxu0 0.0
    %157 = vmatpush.msra.mxu0 0.0
    %158 = vmatpush.msra.mxu0 0.0
    %159 = vmatpush.msra.mxu0 0.0
    %160 = vmatpush.msra.mxu0 0.0
    %161 = vmatpush.msra.mxu0 %v103
    %162 = vmatmul.f32.gmra.mxu0 %v77
    %v163 = vpop.f32.mrf.mxu0
    %v164 = vadd.f32 0.0, %v163
    %165 = vmatmul.f32.gmra.mxu0 %v80
    %v166 = vpop.f32.mrf.mxu0
    %v167 = vadd.f32 0.0, %v166
    %168 = vmatmul.f32.gmra.mxu0 %v83
    %v169 = vpop.f32.mrf.mxu0
    %v170 = vadd.f32 0.0, %v169
    %171 = vmatmul.f32.gmra.mxu0 %v86
    %v172 = vpop.f32.mrf.mxu0
    %v173 = vadd.f32 0.0, %v172
    %174 = vmatmul.f32.gmra.mxu0 %v89
    %v175 = vpop.f32.mrf.mxu0
    %v176 = vadd.f32 0.0, %v175
    %177 = vmatmul.f32.gmra.mxu0 %v92
    %v178 = vpop.f32.mrf.mxu0
    %v179 = vadd.f32 0.0, %v178
    %180 = vmatmul.f32.gmra.mxu0 %v95
    %v181 = vpop.f32.mrf.mxu0
    %v182 = vadd.f32 0.0, %v181
    %183 = vmatmul.f32.gmra.mxu0 %v98
    %v184 = vpop.f32.mrf.mxu0
    %v185 = vadd.f32 0.0, %v184
    %186 = vdwg.mxu0
    %vm187 = vcmask 89088
    %v189 = vsel %vm187, %v50, 0
    %v192 = vsel %vm187, %v51, 0
    %v195 = vsel %vm187, %v52, 0
    %v198 = vsel %vm187, %v53, 0
    %v201 = vsel %vm187, %v54, 0
    %v204 = vsel %vm187, %v55, 0
    %v207 = vsel %vm187, %v56, 0
    %v210 = vsel %vm187, %v57, 0
    %v213 = vsel %vm100, %v68, 0
    %v216 = vsel %vm100, %v69, 0
    %218 = vmatpush.msra.mxu0 0.0
    %219 = vmatpush.msra.mxu0 0.0
    %220 = vmatpush.msra.mxu0 0.0
    %221 = vmatpush.msra.mxu0 0.0
    %222 = vmatpush.msra.mxu0 0.0
    %223 = vmatpush.msra.mxu0 0.0
    %224 = vmatpush.msra.mxu0 0.0
    %225 = vmatpush.msra.mxu0 0.0
    %226 = vmatpush.msra.mxu0 0.0
    %227 = vmatpush.msra.mxu0 0.0
    %228 = vmatpush.msra.mxu0 0.0
    %229 = vmatpush.msra.mxu0 0.0
    %230 = vmatpush.msra.mxu0 0.0
    %231 = vmatpush.msra.mxu0 0.0
    %232 = vmatpush.msra.mxu0 %v213
    %233 = vmatpush.msra.mxu0 %v66
    %234 = vmatmul.f32.gmra.mxu0 %v189
    %v235 = vpop.f32.mrf.mxu0
    %v236 = vadd.f32 %v123, %v235
    %237 = vmatmul.f32.gmra.mxu0 %v192
    %v238 = vpop.f32.mrf.mxu0
    %v239 = vadd.f32 %v126, %v238
    %240 = vmatmul.f32.gmra.mxu0 %v195
    %v241 = vpop.f32.mrf.mxu0
    %v242 = vadd.f32 %v129, %v241
    %243 = vmatmul.f32.gmra.mxu0 %v198
    %v244 = vpop.f32.mrf.mxu0
    %v245 = vadd.f32 %v132, %v244
    %246 = vmatmul.f32.gmra.mxu0 %v201
    %v247 = vpop.f32.mrf.mxu0
    %v248 = vadd.f32 %v135, %v247
    %249 = vmatmul.f32.gmra.mxu0 %v204
    %v250 = vpop.f32.mrf.mxu0
    %v251 = vadd.f32 %v138, %v250
    %252 = vmatmul.f32.gmra.mxu0 %v207
    %v253 = vpop.f32.mrf.mxu0
    %v254 = vadd.f32 %v141, %v253
    %255 = vmatmul.f32.gmra.mxu0 %v210
    %v256 = vpop.f32.mrf.mxu0
    %v257 = vadd.f32 %v144, %v256
    %258 = vdwg.mxu0
    %259 = vmatpush.msra.mxu0 0.0
    %260 = vmatpush.msra.mxu0 0.0
    %261 = vmatpush.msra.mxu0 0.0
    %262 = vmatpush.msra.mxu0 0.0
    %263 = vmatpush.msra.mxu0 0.0
    %264 = vmatpush.msra.mxu0 0.0
    %265 = vmatpush.msra.mxu0 0.0
    %266 = vmatpush.msra.mxu0 0.0
    %267 = vmatpush.msra.mxu0 0.0
    %268 = vmatpush.msra.mxu0 0.0
    %269 = vmatpush.msra.mxu0 0.0
    %270 = vmatpush.msra.mxu0 0.0
    %271 = vmatpush.msra.mxu0 0.0
    %272 = vmatpush.msra.mxu0 0.0
    %273 = vmatpush.msra.mxu0 %v216
    %274 = vmatpush.msra.mxu0 %v67
    %275 = vmatmul.f32.gmra.mxu0 %v189
    %v276 = vpop.f32.mrf.mxu0
    %v277 = vadd.f32 %v164, %v276
    %278 = vmatmul.f32.gmra.mxu0 %v192
    %v279 = vpop.f32.mrf.mxu0
    %v280 = vadd.f32 %v167, %v279
    %281 = vmatmul.f32.gmra.mxu0 %v195
    %v282 = vpop.f32.mrf.mxu0
    %v283 = vadd.f32 %v170, %v282
    %284 = vmatmul.f32.gmra.mxu0 %v198
    %v285 = vpop.f32.mrf.mxu0
    %v286 = vadd.f32 %v173, %v285
    %287 = vmatmul.f32.gmra.mxu0 %v201
    %v288 = vpop.f32.mrf.mxu0
    %v289 = vadd.f32 %v176, %v288
    %290 = vmatmul.f32.gmra.mxu0 %v204
    %v291 = vpop.f32.mrf.mxu0
    %v292 = vadd.f32 %v179, %v291
    %293 = vmatmul.f32.gmra.mxu0 %v207
    %v294 = vpop.f32.mrf.mxu0
    %v295 = vadd.f32 %v182, %v294
    %296 = vmatmul.f32.gmra.mxu0 %v210
    %v297 = vpop.f32.mrf.mxu0
    %v298 = vadd.f32 %v185, %v297
    %299 = vdwg.mxu0
    %v300 = vld [vmem:[%s4] sm:$0x3]
    %v302 = vperm.slane %v300, 0
    %v303 = vperm.slane %v300, 1
    %v306 = vadd.f32 %v236, %v302
    %v307 = vadd.f32 %v277, %v303
    %v308 = vadd.f32 %v239, %v302
    %v309 = vadd.f32 %v280, %v303
    %v310 = vadd.f32 %v242, %v302
    %v311 = vadd.f32 %v283, %v303
    %v312 = vadd.f32 %v245, %v302
    %v313 = vadd.f32 %v286, %v303
    %v314 = vadd.f32 %v248, %v302
    %v315 = vadd.f32 %v289, %v303
    %v316 = vadd.f32 %v251, %v302
    %v317 = vadd.f32 %v292, %v303
    %v318 = vadd.f32 %v254, %v302
    %v319 = vadd.f32 %v295, %v303
    %v320 = vadd.f32 %v257, %v302
    %v321 = vadd.f32 %v298, %v303
    %v322 = vmax.f32 %v306, 0.0
    %v323 = vmax.f32 %v307, 0.0
    %v324 = vmax.f32 %v308, 0.0
    %v325 = vmax.f32 %v309, 0.0
    %v326 = vmax.f32 %v310, 0.0
    %v327 = vmax.f32 %v311, 0.0
    %v328 = vmax.f32 %v312, 0.0
    %v329 = vmax.f32 %v313, 0.0
    %v330 = vmax.f32 %v314, 0.0
    %v331 = vmax.f32 %v315, 0.0
    %v332 = vmax.f32 %v316, 0.0
    %v333 = vmax.f32 %v317, 0.0
    %v334 = vmax.f32 %v318, 0.0
    %v335 = vmax.f32 %v319, 0.0
    %v336 = vmax.f32 %v320, 0.0
    %v337 = vmax.f32 %v321, 0.0
    %v338 = vld [vmem:[#allocation3] sm:$0xff]
    %v339 = vld [vmem:[#allocation3 + $0x8] sm:$0xff]
    %v340 = vld [vmem:[#allocation3 + $0x10] sm:$0xff]
    %v341 = vld [vmem:[#allocation3 + $0x18] sm:$0xff]
    %v342 = vld [vmem:[#allocation3 + $0x20] sm:$0xff]
    %v343 = vld [vmem:[#allocation3 + $0x28] sm:$0xff]
    %v344 = vld [vmem:[#allocation3 + $0x30] sm:$0xff]
    %v345 = vld [vmem:[#allocation3 + $0x38] sm:$0xff]
    %v346 = vld [vmem:[#allocation3 + $0x40] sm:$0xff]
    %v347 = vld [vmem:[#allocation3 + $0x48] sm:$0xff]
    %v348 = vld [vmem:[#allocation3 + $0x50] sm:$0xff]
    %v349 = vld [vmem:[#allocation3 + $0x58] sm:$0xff]
    %v350 = vld [vmem:[#allocation3 + $0x60] sm:$0xff]
    %v351 = vld [vmem:[#allocation3 + $0x68] sm:$0xff]
    %v352 = vld [vmem:[#allocation3 + $0x70] sm:$0xff]
    %v353 = vld [vmem:[#allocation3 + $0x78] sm:$0xff]
    %v354 = vld [vmem:[#allocation3 + $0x80] sm:$0xff]
    %v355 = vld [vmem:[#allocation3 + $0x88] sm:$0xff]
    %v356 = vld [vmem:[#allocation3 + $0x90] sm:$0xff]
    %v357 = vld [vmem:[#allocation3 + $0x98] sm:$0xff]
    %v358 = vld [vmem:[#allocation3 + $0xa0] sm:$0xff]
    %v359 = vld [vmem:[#allocation3 + $0xa8] sm:$0xff]
    %v360 = vld [vmem:[#allocation3 + $0xb0] sm:$0xff]
    %v361 = vld [vmem:[#allocation3 + $0xb8] sm:$0xff]
    %v362 = vld [vmem:[#allocation3 + $0xc0] sm:$0xff]
    %v363 = vld [vmem:[#allocation3 + $0xc8] sm:$0xff]
    %v364 = vld [vmem:[#allocation3 + $0xd0] sm:$0xff]
    %v365 = vld [vmem:[#allocation3 + $0xd8] sm:$0xff]
    %v366 = vld [vmem:[#allocation3 + $0xe0] sm:$0xff]
    %v367 = vld [vmem:[#allocation3 + $0xe8] sm:$0xff]
    %v368 = vld [vmem:[#allocation3 + $0xf0] sm:$0xff]
    %v369 = vld [vmem:[#allocation3 + $0xf8] sm:$0xff]
    %v370 = vld [vmem:[#allocation3 + $0x100] sm:$0xff]
    %v371 = vld [vmem:[#allocation3 + $0x108] sm:$0xff]
    %v372 = vld [vmem:[#allocation3 + $0x110] sm:$0xff]
    %v373 = vld [vmem:[#allocation3 + $0x118] sm:$0xff]
    %v374 = vld [vmem:[#allocation3 + $0x120] sm:$0xff]
    %v375 = vld [vmem:[#allocation3 + $0x128] sm:$0xff]
    %v376 = vld [vmem:[#allocation3 + $0x130] sm:$0xff]
    %v377 = vld [vmem:[#allocation3 + $0x138] sm:$0xff]
    %v378 = vld [vmem:[#allocation3 + $0x140] sm:$0xff]
    %v379 = vld [vmem:[#allocation3 + $0x148] sm:$0xff]
    %v380 = vld [vmem:[#allocation3 + $0x150] sm:$0xff]
    %v381 = vld [vmem:[#allocation3 + $0x158] sm:$0xff]
    %v382 = vld [vmem:[#allocation3 + $0x160] sm:$0xff]
    %v383 = vld [vmem:[#allocation3 + $0x168] sm:$0xff]
    %v384 = vld [vmem:[#allocation3 + $0x170] sm:$0xff]
    %v385 = vld [vmem:[#allocation3 + $0x178] sm:$0xff]
    %v386 = vld [vmem:[#allocation3 + $0x180] sm:$0xff]
    %v387 = vld [vmem:[#allocation3 + $0x188] sm:$0xff]
    %v388 = vld [vmem:[#allocation3 + $0x190] sm:$0xff]
    %v389 = vld [vmem:[#allocation3 + $0x198] sm:$0xff]
    %v390 = vld [vmem:[#allocation3 + $0x1a0] sm:$0xff]
    %v391 = vld [vmem:[#allocation3 + $0x1a8] sm:$0xff]
    %v392 = vld [vmem:[#allocation3 + $0x1b0] sm:$0xff]
    %v393 = vld [vmem:[#allocation3 + $0x1b8] sm:$0xff]
    %v394 = vld [vmem:[#allocation3 + $0x1c0] sm:$0xff]
    %v395 = vld [vmem:[#allocation3 + $0x1c8] sm:$0xff]
    %v396 = vld [vmem:[#allocation3 + $0x1d0] sm:$0xff]
    %v397 = vld [vmem:[#allocation3 + $0x1d8] sm:$0xff]
    %v398 = vld [vmem:[#allocation3 + $0x1e0] sm:$0xff]
    %v399 = vld [vmem:[#allocation3 + $0x1e8] sm:$0xff]
    %v400 = vld [vmem:[#allocation3 + $0x1f0] sm:$0xff]
    %v401 = vld [vmem:[#allocation3 + $0x1f8] sm:$0xff]
    %v402 = vld [vmem:[%s6] sm:$0x3]
    %v404 = vperm.slane %v402, 0
    %v405 = vperm.slane %v402, 1
    %408 = vmatpush.msra.mxu0 %v368
    %409 = vmatpush.msra.mxu0 %v366
    %410 = vmatpush.msra.mxu0 %v364
    %411 = vmatpush.msra.mxu0 %v362
    %412 = vmatpush.msra.mxu0 %v360
    %413 = vmatpush.msra.mxu0 %v358
    %414 = vmatpush.msra.mxu0 %v356
    %415 = vmatpush.msra.mxu0 %v354
    %416 = vmatpush.msra.mxu0 %v352
    %417 = vmatpush.msra.mxu0 %v350
    %418 = vmatpush.msra.mxu0 %v348
    %419 = vmatpush.msra.mxu0 %v346
    %420 = vmatpush.msra.mxu0 %v344
    %421 = vmatpush.msra.mxu0 %v342
    %422 = vmatpush.msra.mxu0 %v340
    %423 = vmatpush.msra.mxu0 %v338
    %424 = vmatmul.f32.gmra.mxu0 %v322
    %v425 = vpop.f32.mrf.mxu0
    %v426 = vadd.f32 %v404, %v425
    %427 = vmatmul.f32.gmra.mxu0 %v324
    %v428 = vpop.f32.mrf.mxu0
    %v429 = vadd.f32 %v404, %v428
    %430 = vmatmul.f32.gmra.mxu0 %v326
    %v431 = vpop.f32.mrf.mxu0
    %v432 = vadd.f32 %v404, %v431
    %433 = vmatmul.f32.gmra.mxu0 %v328
    %v434 = vpop.f32.mrf.mxu0
    %v435 = vadd.f32 %v404, %v434
    %436 = vmatmul.f32.gmra.mxu0 %v330
    %v437 = vpop.f32.mrf.mxu0
    %v438 = vadd.f32 %v404, %v437
    %439 = vmatmul.f32.gmra.mxu0 %v332
    %v440 = vpop.f32.mrf.mxu0
    %v441 = vadd.f32 %v404, %v440
    %442 = vmatmul.f32.gmra.mxu0 %v334
    %v443 = vpop.f32.mrf.mxu0
    %v444 = vadd.f32 %v404, %v443
    %445 = vmatmul.f32.gmra.mxu0 %v336
    %v446 = vpop.f32.mrf.mxu0
    %v447 = vadd.f32 %v404, %v446
    %448 = vdwg.mxu0
    %449 = vmatpush.msra.mxu0 %v400
    %450 = vmatpush.msra.mxu0 %v398
    %451 = vmatpush.msra.mxu0 %v396
    %452 = vmatpush.msra.mxu0 %v394
    %453 = vmatpush.msra.mxu0 %v392
    %454 = vmatpush.msra.mxu0 %v390
    %455 = vmatpush.msra.mxu0 %v388
    %456 = vmatpush.msra.mxu0 %v386
    %457 = vmatpush.msra.mxu0 %v384
    %458 = vmatpush.msra.mxu0 %v382
    %459 = vmatpush.msra.mxu0 %v380
    %460 = vmatpush.msra.mxu0 %v378
    %461 = vmatpush.msra.mxu0 %v376
    %462 = vmatpush.msra.mxu0 %v374
    %463 = vmatpush.msra.mxu0 %v372
    %464 = vmatpush.msra.mxu0 %v370
    %465 = vmatmul.f32.gmra.mxu0 %v323
    %v466 = vpop.f32.mrf.mxu0
    %v467 = vadd.f32 %v426, %v466
    %468 = vmatmul.f32.gmra.mxu0 %v325
    %v469 = vpop.f32.mrf.mxu0
    %v470 = vadd.f32 %v429, %v469
    %471 = vmatmul.f32.gmra.mxu0 %v327
    %v472 = vpop.f32.mrf.mxu0
    %v473 = vadd.f32 %v432, %v472
    %474 = vmatmul.f32.gmra.mxu0 %v329
    %v475 = vpop.f32.mrf.mxu0
    %v476 = vadd.f32 %v435, %v475
    %477 = vmatmul.f32.gmra.mxu0 %v331
    %v478 = vpop.f32.mrf.mxu0
    %v479 = vadd.f32 %v438, %v478
    %480 = vmatmul.f32.gmra.mxu0 %v333
    %v481 = vpop.f32.mrf.mxu0
    %v482 = vadd.f32 %v441, %v481
    %483 = vmatmul.f32.gmra.mxu0 %v335
    %v484 = vpop.f32.mrf.mxu0
    %v485 = vadd.f32 %v444, %v484
    %486 = vmatmul.f32.gmra.mxu0 %v337
    %v487 = vpop.f32.mrf.mxu0
    %v488 = vadd.f32 %v447, %v487
    %489 = vdwg.mxu0
    %490 = vmatpush.msra.mxu0 %v369
    %491 = vmatpush.msra.mxu0 %v367
    %492 = vmatpush.msra.mxu0 %v365
    %493 = vmatpush.msra.mxu0 %v363
    %494 = vmatpush.msra.mxu0 %v361
    %495 = vmatpush.msra.mxu0 %v359
    %496 = vmatpush.msra.mxu0 %v357
    %497 = vmatpush.msra.mxu0 %v355
    %498 = vmatpush.msra.mxu0 %v353
    %499 = vmatpush.msra.mxu0 %v351
    %500 = vmatpush.msra.mxu0 %v349
    %501 = vmatpush.msra.mxu0 %v347
    %502 = vmatpush.msra.mxu0 %v345
    %503 = vmatpush.msra.mxu0 %v343
    %504 = vmatpush.msra.mxu0 %v341
    %505 = vmatpush.msra.mxu0 %v339
    %506 = vmatmul.f32.gmra.mxu0 %v322
    %v507 = vpop.f32.mrf.mxu0
    %v508 = vadd.f32 %v405, %v507
    %509 = vmatmul.f32.gmra.mxu0 %v324
    %v510 = vpop.f32.mrf.mxu0
    %v511 = vadd.f32 %v405, %v510
    %512 = vmatmul.f32.gmra.mxu0 %v326
    %v513 = vpop.f32.mrf.mxu0
    %v514 = vadd.f32 %v405, %v513
    %515 = vmatmul.f32.gmra.mxu0 %v328
    %v516 = vpop.f32.mrf.mxu0
    %v517 = vadd.f32 %v405, %v516
    %518 = vmatmul.f32.gmra.mxu0 %v330
    %v519 = vpop.f32.mrf.mxu0
    %v520 = vadd.f32 %v405, %v519
    %521 = vmatmul.f32.gmra.mxu0 %v332
    %v522 = vpop.f32.mrf.mxu0
    %v523 = vadd.f32 %v405, %v522
    %524 = vmatmul.f32.gmra.mxu0 %v334
    %v525 = vpop.f32.mrf.mxu0
    %v526 = vadd.f32 %v405, %v525
    %527 = vmatmul.f32.gmra.mxu0 %v336
    %v528 = vpop.f32.mrf.mxu0
    %v529 = vadd.f32 %v405, %v528
    %530 = vdwg.mxu0
    %531 = vmatpush.msra.mxu0 %v401
    %532 = vmatpush.msra.mxu0 %v399
    %533 = vmatpush.msra.mxu0 %v397
    %534 = vmatpush.msra.mxu0 %v395
    %535 = vmatpush.msra.mxu0 %v393
    %536 = vmatpush.msra.mxu0 %v391
    %537 = vmatpush.msra.mxu0 %v389
    %538 = vmatpush.msra.mxu0 %v387
    %539 = vmatpush.msra.mxu0 %v385
    %540 = vmatpush.msra.mxu0 %v383
    %541 = vmatpush.msra.mxu0 %v381
    %542 = vmatpush.msra.mxu0 %v379
    %543 = vmatpush.msra.mxu0 %v377
    %544 = vmatpush.msra.mxu0 %v375
    %545 = vmatpush.msra.mxu0 %v373
    %546 = vmatpush.msra.mxu0 %v371
    %547 = vmatmul.f32.gmra.mxu0 %v323
    %v548 = vpop.f32.mrf.mxu0
    %v549 = vadd.f32 %v508, %v548
    %550 = vmatmul.f32.gmra.mxu0 %v325
    %v551 = vpop.f32.mrf.mxu0
    %v552 = vadd.f32 %v511, %v551
    %553 = vmatmul.f32.gmra.mxu0 %v327
    %v554 = vpop.f32.mrf.mxu0
    %v555 = vadd.f32 %v514, %v554
    %556 = vmatmul.f32.gmra.mxu0 %v329
    %v557 = vpop.f32.mrf.mxu0
    %v558 = vadd.f32 %v517, %v557
    %559 = vmatmul.f32.gmra.mxu0 %v331
    %v560 = vpop.f32.mrf.mxu0
    %v561 = vadd.f32 %v520, %v560
    %562 = vmatmul.f32.gmra.mxu0 %v333
    %v563 = vpop.f32.mrf.mxu0
    %v564 = vadd.f32 %v523, %v563
    %565 = vmatmul.f32.gmra.mxu0 %v335
    %v566 = vpop.f32.mrf.mxu0
    %v567 = vadd.f32 %v526, %v566
    %568 = vmatmul.f32.gmra.mxu0 %v337
    %v569 = vpop.f32.mrf.mxu0
    %v570 = vadd.f32 %v529, %v569
    %571 = vdwg.mxu0
    %v572 = vmax.f32 %v467, 0.0
    %v573 = vmax.f32 %v549, 0.0
    %v574 = vmax.f32 %v470, 0.0
    %v575 = vmax.f32 %v552, 0.0
    %v576 = vmax.f32 %v473, 0.0
    %v577 = vmax.f32 %v555, 0.0
    %v578 = vmax.f32 %v476, 0.0
    %v579 = vmax.f32 %v558, 0.0
    %v580 = vmax.f32 %v479, 0.0
    %v581 = vmax.f32 %v561, 0.0
    %v582 = vmax.f32 %v482, 0.0
    %v583 = vmax.f32 %v564, 0.0
    %v584 = vmax.f32 %v485, 0.0
    %v585 = vmax.f32 %v567, 0.0
    %v586 = vmax.f32 %v488, 0.0
    %v587 = vmax.f32 %v570, 0.0
    %v588 = vld [vmem:[%s7] sm:$0x3]
    %v590 = vperm.slane %v588, 0
    %v591 = vperm.slane %v588, 1
    %v594 = vmul.f32 %v572, %v590
    %v595 = vmul.f32 %v573, %v591
    %v596 = vmul.f32 %v574, %v590
    %v597 = vmul.f32 %v575, %v591
    %v598 = vmul.f32 %v576, %v590
    %v599 = vmul.f32 %v577, %v591
    %v600 = vmul.f32 %v578, %v590
    %v601 = vmul.f32 %v579, %v591
    %v602 = vmul.f32 %v580, %v590
    %v603 = vmul.f32 %v581, %v591
    %v604 = vmul.f32 %v582, %v590
    %v605 = vmul.f32 %v583, %v591
    %v606 = vmul.f32 %v584, %v590
    %v607 = vmul.f32 %v585, %v591
    %v608 = vmul.f32 %v586, %v590
    %v609 = vmul.f32 %v587, %v591
    %v610 = vadd.f32 %v594, %v595
    %611 = vadd.xlane.f32.xlu0 %v610
    %v612 = vpop.xlane.xlu0 %611
    %v613 = vadd.f32 %v596, %v597
    %614 = vadd.xlane.f32.xlu0 %v613
    %v615 = vpop.xlane.xlu0 %614
    %v616 = vadd.f32 %v598, %v599
    %617 = vadd.xlane.f32.xlu0 %v616
    %v618 = vpop.xlane.xlu0 %617
    %v619 = vadd.f32 %v600, %v601
    %620 = vadd.xlane.f32.xlu0 %v619
    %v621 = vpop.xlane.xlu0 %620
    %v622 = vadd.f32 %v602, %v603
    %623 = vadd.xlane.f32.xlu0 %v622
    %v624 = vpop.xlane.xlu0 %623
    %v625 = vadd.f32 %v604, %v605
    %626 = vadd.xlane.f32.xlu0 %v625
    %v627 = vpop.xlane.xlu0 %626
    %v628 = vadd.f32 %v606, %v607
    %629 = vadd.xlane.f32.xlu0 %v628
    %v630 = vpop.xlane.xlu0 %629
    %v631 = vadd.f32 %v608, %v609
    %632 = vadd.xlane.f32.xlu0 %v631
    %v633 = vpop.xlane.xlu0 %632
    %v634 = vld [vmem:[#allocation2] sm:$0x1]
    %v636 = vperm.slane %v634, 0
    %v638 = vadd.f32 %v612, %v636
    %v639 = vadd.f32 %v615, %v636
    %v640 = vadd.f32 %v618, %v636
    %v641 = vadd.f32 %v621, %v636
    %v642 = vadd.f32 %v624, %v636
    %v643 = vadd.f32 %v627, %v636
    %v644 = vadd.f32 %v630, %v636
    %v645 = vadd.f32 %v633, %v636
    %vm646 = vcmask 7168
    %647 = vst.msk [vmem:[%s9] sm:$0xff] %vm646, %v638
    %648 = vst.msk [vmem:[%s9 + $0x8] sm:$0xff] %vm646, %v639
    %649 = vst.msk [vmem:[%s9 + $0x10] sm:$0xff] %vm646, %v640
    %650 = vst.msk [vmem:[%s9 + $0x18] sm:$0xff] %vm646, %v641
    %651 = vst.msk [vmem:[%s9 + $0x20] sm:$0xff] %vm646, %v642
    %652 = vst.msk [vmem:[%s9 + $0x28] sm:$0xff] %vm646, %v643
    %653 = vst.msk [vmem:[%s9 + $0x30] sm:$0xff] %vm646, %v644
    %654 = vst.msk [vmem:[%s9 + $0x38] sm:$0xff] %vm646, %v645
    // Predicated region
    $region42: #{tpu_custom_call.1} parent=1 // pred_check
      _
    $region43: #{tpu_custom_call.1} parent=1 // pred_check_branch
      %656 = sbr.rel (0) target = $region45
    $region44: #{tpu_custom_call.1} parent=1 // pred_region
      _
    $region45: #{tpu_custom_call.1} parent=1 // pred_fallthru
      _
    // Predicated region
    $region46: #{tpu_custom_call.1} parent=1 // pred_check
      _
    $region47: #{tpu_custom_call.1} parent=1 // pred_check_branch
      %658 = sbr.rel (0) target = $region49
    $region48: #{tpu_custom_call.1} parent=1 // pred_region
      _
    $region49: #{tpu_custom_call.1} parent=1 // pred_fallthru
      _
    %659 = vsyncpa [#allocation4], 1

</llo_original>
